<compile_context>
chip_gen: v7x
topology: tpu7x:2x2x1
jax: 0.10.0
libtpu: 0.0.40
codegen_flags: <defaults>
</compile_context>

<pallas_src>
import functools

import numpy as np
import jax
import jax.numpy as jnp
from jax.experimental import pallas as pl
from jax.experimental.pallas import tpu as pltpu


def _build_plan(radius, n_points):
    """Static interpolation plan (skimage 'default' method, cval=0).

    Returns (corners, samples):
      corners: sorted distinct non-center (dr, dc) neighbor offsets
      samples: per LBP bit p: (terms, 2**p) where terms = (((dr,dc), w), ...)
               are the bilinear weights applied to (neighbor - center) diffs.
               Terms on the center corner are dropped (their diff is exactly 0).
    """
    angles = 2.0 * np.pi * np.arange(n_points, dtype=np.float64) / n_points
    rp = np.round(-radius * np.sin(angles), 15)
    cp = np.round(radius * np.cos(angles), 15)
    corner_set = set()
    samples = []
    for p in range(n_points):
        r, c = float(rp[p]), float(cp[p])
        minr, maxr = int(np.floor(r)), int(np.ceil(r))
        minc, maxc = int(np.floor(c)), int(np.ceil(c))
        dr, dc = r - minr, c - minc
        if minr == maxr and minc == maxc:
            raw = [((minr, minc), 1.0)]
        else:
            raw = [((minr, minc), (1.0 - dr) * (1.0 - dc)),
                   ((minr, maxc), (1.0 - dr) * dc),
                   ((maxr, minc), dr * (1.0 - dc)),
                   ((maxr, maxc), dr * dc)]
        terms = tuple((cor, float(w)) for cor, w in raw
                      if w != 0.0 and cor != (0, 0))
        samples.append((terms, float(2 ** p)))
        corner_set.update(cor for cor, _ in terms)
    return tuple(sorted(corner_set)), tuple(samples)


def _build_masks(corners, H, W):
    """{0,1} float32 validity mask per corner offset, flattened to (nc, H*W)."""
    i = np.arange(H)[:, None]
    j = np.arange(W)[None, :]
    rows = []
    for dr, dc in corners:
        m = (i + dr >= 0) & (i + dr < H) & (j + dc >= 0) & (j + dc < W)
        rows.append(m.astype(np.float32).reshape(-1))
    return np.stack(rows, axis=0)


def _vmem_capacity_bytes():
    try:
        return int(pltpu.get_tpu_info().vmem_capacity_bytes)
    except Exception:
        return 64 << 20  # conservative fallback: v7x per-TensorCore VMEM


def _pick_tile(bc, hw, n_corners, in_itemsize, vmem_cap):
    """Tile over the fused B*C axis.

    Budget counts double-buffered in/out blocks plus the elementwise
    temporaries of the unrolled sample loop (diff planes, acc, rolled plane).
    Keeps tile a multiple of 8 (block second-minor constraint) and prefers
    >= 2 grid steps so DMA/compute overlap (and both v7x TCs) have work.
    """
    budget = min(vmem_cap // 2, 48 << 20)       # ~32 MiB on v7x, 48 MiB v5e/v6e
    temps = n_corners + 6                       # diff planes + center/acc/slack
    per_row = hw * (2 * in_itemsize + 4 * (2 + temps))
    cap_rows = max(8, (int(budget // max(per_row, 1)) // 8) * 8)
    if bc <= 8:
        return bc                               # single block == full dim
    if bc <= cap_rows:
        half = (bc + 1) // 2                    # split into >= 2 blocks
        return min(((half + 7) // 8) * 8, cap_rows)
    return cap_rows


def _lane_roll(x, shift, hw):
    """np.roll-semantics shift along the lane (last) axis."""
    if shift == 0:
        return x
    if hw % 128 == 0:
        return pltpu.roll(x, shift, axis=1)     # XLU lane rotate
    return jnp.roll(x, shift, axis=1)           # slice+concat fallback


def _lbp_kernel(mask_ref, x_ref, o_ref, *, corners, samples, W):
    # mask_ref: (n_corners, H*W) float32 {0,1} border masks (cval=0 semantics)
    # x_ref   : (tile, H*W)      input planes, flattened (lane-dense)
    # o_ref   : (tile, H*W)      float32 LBP codes
    x = x_ref[...].astype(jnp.float32)
    masks = mask_ref[...]
    HW = x.shape[-1]

    # One roll (XLU) + one mask mul + one subtract per distinct neighbor
    # offset, reused by every sample point that references it.
    diffs = {}
    for ci, (dr, dc) in enumerate(corners):
        shift = (-(dr * W + dc)) % HW
        rolled = _lane_roll(x, shift, HW)
        nb = rolled * masks[ci:ci + 1, :]       # zero outside the image
        diffs[(dr, dc)] = nb - x

    acc = jnp.zeros_like(x)
    for terms, weight in samples:
        if not terms:                           # sample collapsed onto center
            acc = acc + jnp.float32(weight)
            continue
        val = None
        for cor, w in terms:
            t = diffs[cor] if w == 1.0 else diffs[cor] * jnp.float32(w)
            val = t if val is None else val + t
        # interpolated difference >= 0  <=>  interpolated neighbor >= center
        acc = acc + jnp.where(val >= 0.0, jnp.float32(weight), jnp.float32(0.0))
    o_ref[...] = acc


def lbp_transform(x, radius=1, n_points=8):
    """x: (B, C, H, W) -> (B, C, H, W) float32 LBP codes (skimage 'default')."""
    B, C, H, W = x.shape
    BC, HW = B * C, H * W
    corners, samples = _build_plan(radius, n_points)
    masks = jnp.asarray(_build_masks(corners, H, W))           # (nc, HW)

    vmem_cap = _vmem_capacity_bytes()
    tile = _pick_tile(BC, HW, len(corners), x.dtype.itemsize, vmem_cap)
    grid = (pl.cdiv(BC, tile),)

    x2 = x.reshape(BC, HW)     # free reshape: merge leading dims, flatten plane

    flops_per_px = 3 * len(corners) + sum(2 * len(t) + 2 for t, _ in samples)
    cost = pl.CostEstimate(
        flops=BC * HW * flops_per_px,
        transcendentals=0,
        bytes_accessed=x2.size * x2.dtype.itemsize + BC * HW * 4 + masks.size * 4)

    kernel = functools.partial(_lbp_kernel, corners=corners, samples=samples, W=W)
    out = pl.pallas_call(
        kernel,
        out_shape=jax.ShapeDtypeStruct((BC, HW), jnp.float32),
        grid_spec=pltpu.PrefetchScalarGridSpec(
            num_scalar_prefetch=0,
            grid=grid,
            in_specs=[
                pl.BlockSpec((len(corners), HW), lambda i: (0, 0)),  # masks
                pl.BlockSpec((tile, HW), lambda i: (i, 0)),          # planes
            ],
            out_specs=pl.BlockSpec((tile, HW), lambda i: (i, 0)),
        ),
        compiler_params=pltpu.CompilerParams(
            dimension_semantics=("parallel",),
            vmem_limit_bytes=int(min(0.9 * vmem_cap, 100 << 20))),
        cost_estimate=cost,
    )(masks, x2)
    return out.reshape(B, C, H, W)


def _lbp_reference_np(x, radius=1, n_points=8):
    """Pure-numpy float32 reference mirroring the kernel arithmetic."""
    x = np.asarray(x, np.float32)
    B, C, H, W = x.shape
    _, samples = _build_plan(radius, n_points)
    pad = int(np.ceil(radius))
    xp = np.pad(x, ((0, 0), (0, 0), (pad, pad), (pad, pad)))   # cval = 0

    def nb(dr, dc):
        return xp[:, :, pad + dr:pad + dr + H, pad + dc:pad + dc + W]

    out = np.zeros_like(x)
    for terms, weight in samples:
        if not terms:
            out += np.float32(weight)
            continue
        val = None
        for cor, w in terms:
            d = nb(*cor) - x
            t = d if w == 1.0 else d * np.float32(w)
            val = t if val is None else val + t
        out += (val >= 0).astype(np.float32) * np.float32(weight)
    return out


if __name__ == "__main__":
    key = jax.random.PRNGKey(0)
    B, C, H, W = 2, 4, 16, 16
    x = jax.random.uniform(key, (B, C, H, W), dtype=jnp.float32)

    out = lbp_transform(x, radius=1, n_points=8)
    out = jax.block_until_ready(out)

    ref = _lbp_reference_np(np.asarray(x), radius=1, n_points=8)
    assert out.shape == (B, C, H, W) and out.dtype == jnp.float32
    assert float(np.max(np.asarray(out))) <= float(2 ** 8 - 1)
    # Allow a tiny fraction of flips from float rounding at the >= boundary.
    mismatch = np.mean(np.asarray(out) != ref)
    assert mismatch < 0.01, f"too many mismatching pixels: {mismatch}"

    print("KERNEL_OK")
</pallas_src>

<mosaic_0001>
module attributes {stable_mosaic.version = 11 : i64} {
  func.func @_lbp_kernel(%arg0: i32, %arg1: memref<8x256xf32, #tpu.memory_space<vmem>>, %arg2: memref<8x256xf32, #tpu.memory_space<vmem>>, %arg3: memref<8x256xf32, #tpu.memory_space<vmem>>) attributes {dimension_semantics = [#tpu.dimension_semantics<parallel>], iteration_bounds = array<i64: 1>, scalar_prefetch = 0 : i64, scratch_operands = 0 : i64, tpu.core_type = #tpu.core_type<tc>, window_params = [{pipeline_mode = #tpu.pipeline_mode<synchronous>, transform_indices = @transform_0, window_bounds = array<i64: 8, 256>}, {transform_indices = @transform_1, window_bounds = array<i64: 8, 256>}, {transform_indices = @transform_2, window_bounds = array<i64: 8, 256>}]} {
    %c0 = arith.constant 0 : index
    %c0_0 = arith.constant 0 : index
    %0 = vector.load %arg2[%c0, %c0_0] : memref<8x256xf32, #tpu.memory_space<vmem>>, vector<8x256xf32>
    %c0_1 = arith.constant 0 : index
    %c0_2 = arith.constant 0 : index
    %1 = vector.load %arg1[%c0_1, %c0_2] : memref<8x256xf32, #tpu.memory_space<vmem>>, vector<8x256xf32>
    %c17_i32 = arith.constant 17 : i32
    %2 = tpu.dynamic_rotate %0 by %c17_i32 dim 1 : vector<8x256xf32>, i32 -> vector<8x256xf32>
    %3 = vector.extract_strided_slice %1 {offsets = [0, 0], sizes = [1, 256], strides = [1, 1]} : vector<8x256xf32> to vector<1x256xf32>
    %4 = vector.broadcast %3 : vector<1x256xf32> to vector<8x256xf32>
    %5 = arith.mulf %2, %4 : vector<8x256xf32>
    %6 = arith.subf %5, %0 : vector<8x256xf32>
    %c16_i32 = arith.constant 16 : i32
    %7 = tpu.dynamic_rotate %0 by %c16_i32 dim 1 : vector<8x256xf32>, i32 -> vector<8x256xf32>
    %8 = vector.extract_strided_slice %1 {offsets = [1, 0], sizes = [1, 256], strides = [1, 1]} : vector<8x256xf32> to vector<1x256xf32>
    %9 = vector.broadcast %8 : vector<1x256xf32> to vector<8x256xf32>
    %10 = arith.mulf %7, %9 : vector<8x256xf32>
    %11 = arith.subf %10, %0 : vector<8x256xf32>
    %c15_i32 = arith.constant 15 : i32
    %12 = tpu.dynamic_rotate %0 by %c15_i32 dim 1 : vector<8x256xf32>, i32 -> vector<8x256xf32>
    %13 = vector.extract_strided_slice %1 {offsets = [2, 0], sizes = [1, 256], strides = [1, 1]} : vector<8x256xf32> to vector<1x256xf32>
    %14 = vector.broadcast %13 : vector<1x256xf32> to vector<8x256xf32>
    %15 = arith.mulf %12, %14 : vector<8x256xf32>
    %16 = arith.subf %15, %0 : vector<8x256xf32>
    %c1_i32 = arith.constant 1 : i32
    %17 = tpu.dynamic_rotate %0 by %c1_i32 dim 1 : vector<8x256xf32>, i32 -> vector<8x256xf32>
    %18 = vector.extract_strided_slice %1 {offsets = [3, 0], sizes = [1, 256], strides = [1, 1]} : vector<8x256xf32> to vector<1x256xf32>
    %19 = vector.broadcast %18 : vector<1x256xf32> to vector<8x256xf32>
    %20 = arith.mulf %17, %19 : vector<8x256xf32>
    %21 = arith.subf %20, %0 : vector<8x256xf32>
    %c255_i32 = arith.constant 255 : i32
    %22 = tpu.dynamic_rotate %0 by %c255_i32 dim 1 : vector<8x256xf32>, i32 -> vector<8x256xf32>
    %23 = vector.extract_strided_slice %1 {offsets = [4, 0], sizes = [1, 256], strides = [1, 1]} : vector<8x256xf32> to vector<1x256xf32>
    %24 = vector.broadcast %23 : vector<1x256xf32> to vector<8x256xf32>
    %25 = arith.mulf %22, %24 : vector<8x256xf32>
    %26 = arith.subf %25, %0 : vector<8x256xf32>
    %c241_i32 = arith.constant 241 : i32
    %27 = tpu.dynamic_rotate %0 by %c241_i32 dim 1 : vector<8x256xf32>, i32 -> vector<8x256xf32>
    %28 = vector.extract_strided_slice %1 {offsets = [5, 0], sizes = [1, 256], strides = [1, 1]} : vector<8x256xf32> to vector<1x256xf32>
    %29 = vector.broadcast %28 : vector<1x256xf32> to vector<8x256xf32>
    %30 = arith.mulf %27, %29 : vector<8x256xf32>
    %31 = arith.subf %30, %0 : vector<8x256xf32>
    %c240_i32 = arith.constant 240 : i32
    %32 = tpu.dynamic_rotate %0 by %c240_i32 dim 1 : vector<8x256xf32>, i32 -> vector<8x256xf32>
    %33 = vector.extract_strided_slice %1 {offsets = [6, 0], sizes = [1, 256], strides = [1, 1]} : vector<8x256xf32> to vector<1x256xf32>
    %34 = vector.broadcast %33 : vector<1x256xf32> to vector<8x256xf32>
    %35 = arith.mulf %32, %34 : vector<8x256xf32>
    %36 = arith.subf %35, %0 : vector<8x256xf32>
    %c239_i32 = arith.constant 239 : i32
    %37 = tpu.dynamic_rotate %0 by %c239_i32 dim 1 : vector<8x256xf32>, i32 -> vector<8x256xf32>
    %38 = vector.extract_strided_slice %1 {offsets = [7, 0], sizes = [1, 256], strides = [1, 1]} : vector<8x256xf32> to vector<1x256xf32>
    %39 = vector.broadcast %38 : vector<1x256xf32> to vector<8x256xf32>
    %40 = arith.mulf %37, %39 : vector<8x256xf32>
    %41 = arith.subf %40, %0 : vector<8x256xf32>
    %cst = arith.constant 0.000000e+00 : f32
    %42 = vector.broadcast %cst : f32 to vector<8x256xf32>
    %cst_3 = arith.constant 0.000000e+00 : f32
    %43 = vector.broadcast %cst_3 : f32 to vector<8x256xf32>
    %44 = arith.cmpf oge, %26, %43 : vector<8x256xf32>
    %cst_4 = arith.constant 1.000000e+00 : f32
    %cst_5 = arith.constant 0.000000e+00 : f32
    %45 = vector.broadcast %cst_4 : f32 to vector<8x256xf32>
    %46 = vector.broadcast %cst_5 : f32 to vector<8x256xf32>
    %47 = arith.select %44, %45, %46 : vector<8x256xi1>, vector<8x256xf32>
    %48 = arith.addf %42, %47 : vector<8x256xf32>
    %cst_6 = arith.constant 0.207106784 : f32
    %49 = vector.broadcast %cst_6 : f32 to vector<8x256xf32>
    %50 = arith.mulf %11, %49 : vector<8x256xf32>
    %cst_7 = arith.constant 5.000000e-01 : f32
    %51 = vector.broadcast %cst_7 : f32 to vector<8x256xf32>
    %52 = arith.mulf %16, %51 : vector<8x256xf32>
    %53 = arith.addf %50, %52 : vector<8x256xf32>
    %cst_8 = arith.constant 0.207106784 : f32
    %54 = vector.broadcast %cst_8 : f32 to vector<8x256xf32>
    %55 = arith.mulf %26, %54 : vector<8x256xf32>
    %56 = arith.addf %53, %55 : vector<8x256xf32>
    %cst_9 = arith.constant 0.000000e+00 : f32
    %57 = vector.broadcast %cst_9 : f32 to vector<8x256xf32>
    %58 = arith.cmpf oge, %56, %57 : vector<8x256xf32>
    %cst_10 = arith.constant 2.000000e+00 : f32
    %cst_11 = arith.constant 0.000000e+00 : f32
    %59 = vector.broadcast %cst_10 : f32 to vector<8x256xf32>
    %60 = vector.broadcast %cst_11 : f32 to vector<8x256xf32>
    %61 = arith.select %58, %59, %60 : vector<8x256xi1>, vector<8x256xf32>
    %62 = arith.addf %48, %61 : vector<8x256xf32>
    %cst_12 = arith.constant 0.000000e+00 : f32
    %63 = vector.broadcast %cst_12 : f32 to vector<8x256xf32>
    %64 = arith.cmpf oge, %11, %63 : vector<8x256xf32>
    %cst_13 = arith.constant 4.000000e+00 : f32
    %cst_14 = arith.constant 0.000000e+00 : f32
    %65 = vector.broadcast %cst_13 : f32 to vector<8x256xf32>
    %66 = vector.broadcast %cst_14 : f32 to vector<8x256xf32>
    %67 = arith.select %64, %65, %66 : vector<8x256xi1>, vector<8x256xf32>
    %68 = arith.addf %62, %67 : vector<8x256xf32>
    %cst_15 = arith.constant 5.000000e-01 : f32
    %69 = vector.broadcast %cst_15 : f32 to vector<8x256xf32>
    %70 = arith.mulf %6, %69 : vector<8x256xf32>
    %cst_16 = arith.constant 0.207106784 : f32
    %71 = vector.broadcast %cst_16 : f32 to vector<8x256xf32>
    %72 = arith.mulf %11, %71 : vector<8x256xf32>
    %73 = arith.addf %70, %72 : vector<8x256xf32>
    %cst_17 = arith.constant 0.207106784 : f32
    %74 = vector.broadcast %cst_17 : f32 to vector<8x256xf32>
    %75 = arith.mulf %21, %74 : vector<8x256xf32>
    %76 = arith.addf %73, %75 : vector<8x256xf32>
    %cst_18 = arith.constant 0.000000e+00 : f32
    %77 = vector.broadcast %cst_18 : f32 to vector<8x256xf32>
    %78 = arith.cmpf oge, %76, %77 : vector<8x256xf32>
    %cst_19 = arith.constant 8.000000e+00 : f32
    %cst_20 = arith.constant 0.000000e+00 : f32
    %79 = vector.broadcast %cst_19 : f32 to vector<8x256xf32>
    %80 = vector.broadcast %cst_20 : f32 to vector<8x256xf32>
    %81 = arith.select %78, %79, %80 : vector<8x256xi1>, vector<8x256xf32>
    %82 = arith.addf %68, %81 : vector<8x256xf32>
    %cst_21 = arith.constant 0.000000e+00 : f32
    %83 = vector.broadcast %cst_21 : f32 to vector<8x256xf32>
    %84 = arith.cmpf oge, %21, %83 : vector<8x256xf32>
    %cst_22 = arith.constant 1.600000e+01 : f32
    %cst_23 = arith.constant 0.000000e+00 : f32
    %85 = vector.broadcast %cst_22 : f32 to vector<8x256xf32>
    %86 = vector.broadcast %cst_23 : f32 to vector<8x256xf32>
    %87 = arith.select %84, %85, %86 : vector<8x256xi1>, vector<8x256xf32>
    %88 = arith.addf %82, %87 : vector<8x256xf32>
    %cst_24 = arith.constant 0.207106784 : f32
    %89 = vector.broadcast %cst_24 : f32 to vector<8x256xf32>
    %90 = arith.mulf %21, %89 : vector<8x256xf32>
    %cst_25 = arith.constant 5.000000e-01 : f32
    %91 = vector.broadcast %cst_25 : f32 to vector<8x256xf32>
    %92 = arith.mulf %31, %91 : vector<8x256xf32>
    %93 = arith.addf %90, %92 : vector<8x256xf32>
    %cst_26 = arith.constant 0.207106784 : f32
    %94 = vector.broadcast %cst_26 : f32 to vector<8x256xf32>
    %95 = arith.mulf %36, %94 : vector<8x256xf32>
    %96 = arith.addf %93, %95 : vector<8x256xf32>
    %cst_27 = arith.constant 0.000000e+00 : f32
    %97 = vector.broadcast %cst_27 : f32 to vector<8x256xf32>
    %98 = arith.cmpf oge, %96, %97 : vector<8x256xf32>
    %cst_28 = arith.constant 3.200000e+01 : f32
    %cst_29 = arith.constant 0.000000e+00 : f32
    %99 = vector.broadcast %cst_28 : f32 to vector<8x256xf32>
    %100 = vector.broadcast %cst_29 : f32 to vector<8x256xf32>
    %101 = arith.select %98, %99, %100 : vector<8x256xi1>, vector<8x256xf32>
    %102 = arith.addf %88, %101 : vector<8x256xf32>
    %cst_30 = arith.constant 0.000000e+00 : f32
    %103 = vector.broadcast %cst_30 : f32 to vector<8x256xf32>
    %104 = arith.cmpf oge, %36, %103 : vector<8x256xf32>
    %cst_31 = arith.constant 6.400000e+01 : f32
    %cst_32 = arith.constant 0.000000e+00 : f32
    %105 = vector.broadcast %cst_31 : f32 to vector<8x256xf32>
    %106 = vector.broadcast %cst_32 : f32 to vector<8x256xf32>
    %107 = arith.select %104, %105, %106 : vector<8x256xi1>, vector<8x256xf32>
    %108 = arith.addf %102, %107 : vector<8x256xf32>
    %cst_33 = arith.constant 0.207106784 : f32
    %109 = vector.broadcast %cst_33 : f32 to vector<8x256xf32>
    %110 = arith.mulf %26, %109 : vector<8x256xf32>
    %cst_34 = arith.constant 0.207106784 : f32
    %111 = vector.broadcast %cst_34 : f32 to vector<8x256xf32>
    %112 = arith.mulf %36, %111 : vector<8x256xf32>
    %113 = arith.addf %110, %112 : vector<8x256xf32>
    %cst_35 = arith.constant 5.000000e-01 : f32
    %114 = vector.broadcast %cst_35 : f32 to vector<8x256xf32>
    %115 = arith.mulf %41, %114 : vector<8x256xf32>
    %116 = arith.addf %113, %115 : vector<8x256xf32>
    %cst_36 = arith.constant 0.000000e+00 : f32
    %117 = vector.broadcast %cst_36 : f32 to vector<8x256xf32>
    %118 = arith.cmpf oge, %116, %117 : vector<8x256xf32>
    %cst_37 = arith.constant 1.280000e+02 : f32
    %cst_38 = arith.constant 0.000000e+00 : f32
    %119 = vector.broadcast %cst_37 : f32 to vector<8x256xf32>
    %120 = vector.broadcast %cst_38 : f32 to vector<8x256xf32>
    %121 = arith.select %118, %119, %120 : vector<8x256xi1>, vector<8x256xf32>
    %122 = arith.addf %108, %121 : vector<8x256xf32>
    %c0_39 = arith.constant 0 : index
    %c0_40 = arith.constant 0 : index
    %123 = vector.load %arg3[%c0_39, %c0_40] : memref<8x256xf32, #tpu.memory_space<vmem>>, vector<8x256xf32>
    tpu.vector_store %arg3[%c0_39, %c0_40], %122 {strides = array<i32>} : memref<8x256xf32, #tpu.memory_space<vmem>>, vector<8x256xf32>,
    return
  }
  func.func @transform_0(%arg0: i32) -> (i32, i32) {
    %c0_i32 = arith.constant 0 : i32
    %c0_i32_0 = arith.constant 0 : i32
    %c0_i32_1 = arith.constant 0 : i32
    return %c0_i32, %c0_i32_0 : i32, i32
  }
  func.func @transform_1(%arg0: i32) -> (i32, i32) {
    %c0_i32 = arith.constant 0 : i32
    %c0_i32_0 = arith.constant 0 : i32
    return %arg0, %c0_i32 : i32, i32
  }
  func.func @transform_2(%arg0: i32) -> (i32, i32) {
    %c0_i32 = arith.constant 0 : i32
    %c0_i32_0 = arith.constant 0 : i32
    return %arg0, %c0_i32 : i32, i32
  }
}

</mosaic_0001>

<llo_original>
// kernel: tpu_custom_call.1
$region0: #{tpu_custom_call.1}
  #allocation0 [shape = 'u32[]', space=smem, size = 0x4, offset = 0x4, fixed_abs, tag = 'smem constant byte address 0x4 - core index']
  #allocation1 [shape = 'u32[144,128]{1,0:T(1,128)}', space=vmem, size = 0x12000, scoped, tag = 'internal scratch']
  %s0 = inlined_call_operand.hbm [shape: f32[8,256], index: 0, kind: input, shape index: {}]
  %s1 = inlined_call_operand.hbm [shape: f32[8,256], index: 1, kind: input, shape index: {}]
  %s2 = inlined_call_operand.hbm [shape: f32[8,256], index: 2, kind: output, shape index: {}]
  %s3 = sld [smem:[#allocation0]]
  $region26: #{tpu_custom_call.1} parent=0
    _
  %s5 = ssub.s32 1, %s3
  %s6 = scalar_select 0, %s5, %s3
  $region1: #{tpu_custom_call.1} parent=0
    #allocation2 [shape = 'u8[8192]{0}', space=vmem, size = 0x2000, scoped, tag = 'input window, operand 0, single buffered']
    #allocation3 [shape = 's32[1]{0}', space=sflag, size = 0x4, scoped, tag = 'scoped memory for tpu_custom_call.1']
    #allocation4 [shape = 's32[1]{0}', space=sflag, size = 0x4, scoped, tag = 'scoped memory for tpu_custom_call.1']
    #allocation5 [shape = 'u8[8192]{0}', space=vmem, size = 0x2000, scoped, tag = 'input window, operand 1, single buffered']
    #allocation6 [shape = 's32[1]{0}', space=sflag, size = 0x4, scoped, tag = 'scoped memory for tpu_custom_call.1']
    #allocation7 [shape = 'u8[8192]{0}', space=vmem, size = 0x2000, scoped, tag = 'output window, operand 0, single buffered']
    %7 = vsyncpa [#allocation3], 0
    %8 = vsyncpa [#allocation6], 0
    %9 = vsyncpa [#allocation4], 0
    // Predicated region
    $region2: #{tpu_custom_call.1} parent=1 // pred_check
      _
    $region3: #{tpu_custom_call.1} parent=1 // pred_check_branch
      %11 = sbr.rel (0) target = $region5
    $region4: #{tpu_custom_call.1} parent=1 // pred_region
      %s13 = ssub.s32 256, 256
      %14 = vsyncadd [#allocation3], %s13
      %s16 = sshll.u32 [#allocation2], 4
      %s17 = int_to_ptr.vmem [resolvable:$true] %s16
      %19 = dma.hbm_to_vmem [thread:$0]  %s0, 256, %s17, [#allocation3]
    $region5: #{tpu_custom_call.1} parent=1 // pred_fallthru
      _
    // Predicated region
    $region6: #{tpu_custom_call.1} parent=1 // pred_check
      _
    $region7: #{tpu_custom_call.1} parent=1 // pred_check_branch
      %21 = sbr.rel (0) target = $region9
    $region8: #{tpu_custom_call.1} parent=1 // pred_region
      %s23 = ssub.s32 256, 256
      %24 = vsyncadd [#allocation6], %s23
      %s26 = sshll.u32 [#allocation5], 4
      %s27 = int_to_ptr.vmem [resolvable:$true] %s26
      %29 = dma.hbm_to_vmem [thread:$0]  %s1, 256, %s27, [#allocation6]
    $region9: #{tpu_custom_call.1} parent=1 // pred_fallthru
      _
    // Predicated region
    $region10: #{tpu_custom_call.1} parent=1 // pred_check
      _
    $region11: #{tpu_custom_call.1} parent=1 // pred_check_branch
      %31 = sbr.rel (0) target = $region13
    $region12: #{tpu_custom_call.1} parent=1 // pred_region
      %32 = dma.done [#allocation3], 256
    $region13: #{tpu_custom_call.1} parent=1 // pred_fallthru
      _
    // Predicated region
    $region14: #{tpu_custom_call.1} parent=1 // pred_check
      _
    $region15: #{tpu_custom_call.1} parent=1 // pred_check_branch
      %34 = sbr.rel (0) target = $region17
    $region16: #{tpu_custom_call.1} parent=1 // pred_region
      %35 = dma.done [#allocation6], 256
    $region17: #{tpu_custom_call.1} parent=1 // pred_fallthru
      _
    %v36 = vld [vmem:[#allocation5] sm:$0xff]
    %v37 = vld [vmem:[#allocation5 + $0x8] sm:$0xff]
    %v38 = vld [vmem:[#allocation2] sm:$0xff]
    %v39 = vld [vmem:[#allocation2 + $0x8] sm:$0xff]
    %40 = vrot.lane.b32.xlu0 %v36, 17
    %v41 = vpop.permute.xlu0 %40
    %42 = vrot.lane.b32.xlu0 %v37, 17
    %v43 = vpop.permute.xlu0 %42
    %v44 = vlaneseq
    %v45 = vand.u32 %v44, 127
    %vm46 = vcmp.lt.s32.totalorder %v45, 17
    %v47 = vsel %vm46, %v41, %v43
    %v48 = vsel %vm46, %v43, %v41
    %v49 = vlaneseq
    %v50 = vshrl.u32 %v49, 7
    %v51 = vsub.s32 0, %v50
    %v52 = vrot.slane %v38, %v51
    %v53 = vlaneseq
    %v54 = vshrl.u32 %v53, 7
    %v55 = vsub.s32 0, %v54
    %v56 = vrot.slane %v39, %v55
    %v57 = vmul.f32 %v48, %v52
    %v58 = vmul.f32 %v47, %v56
    %v59 = vsub.f32 %v57, %v36
    %v60 = vsub.f32 %v58, %v37
    %61 = vrot.lane.b32.xlu0 %v36, 16
    %v62 = vpop.permute.xlu0 %61
    %63 = vrot.lane.b32.xlu0 %v37, 16
    %v64 = vpop.permute.xlu0 %63
    %vm65 = vcmp.lt.s32.totalorder %v45, 16
    %v66 = vsel %vm65, %v62, %v64
    %v67 = vsel %vm65, %v64, %v62
    %v68 = vlaneseq
    %v69 = vshrl.u32 %v68, 7
    %v70 = vsub.s32 1, %v69
    %v71 = vrot.slane %v38, %v70
    %v72 = vlaneseq
    %v73 = vshrl.u32 %v72, 7
    %v74 = vsub.s32 1, %v73
    %v75 = vrot.slane %v39, %v74
    %v76 = vmul.f32 %v67, %v71
    %v77 = vmul.f32 %v66, %v75
    %v78 = vsub.f32 %v76, %v36
    %v79 = vsub.f32 %v77, %v37
    %80 = vrot.lane.b32.xlu0 %v36, 15
    %v81 = vpop.permute.xlu0 %80
    %82 = vrot.lane.b32.xlu0 %v37, 15
    %v83 = vpop.permute.xlu0 %82
    %vm84 = vcmp.lt.s32.totalorder %v45, 15
    %v85 = vsel %vm84, %v81, %v83
    %v86 = vsel %vm84, %v83, %v81
    %v87 = vlaneseq
    %v88 = vshrl.u32 %v87, 7
    %v89 = vsub.s32 2, %v88
    %v90 = vrot.slane %v38, %v89
    %v91 = vlaneseq
    %v92 = vshrl.u32 %v91, 7
    %v93 = vsub.s32 2, %v92
    %v94 = vrot.slane %v39, %v93
    %v95 = vmul.f32 %v86, %v90
    %v96 = vmul.f32 %v85, %v94
    %v97 = vsub.f32 %v95, %v36
    %v98 = vsub.f32 %v96, %v37
    %99 = vrot.lane.b32.xlu0 %v36, 1
    %v100 = vpop.permute.xlu0 %99
    %101 = vrot.lane.b32.xlu0 %v37, 1
    %v102 = vpop.permute.xlu0 %101
    %vm103 = vcmp.lt.s32.totalorder %v45, 1
    %v104 = vsel %vm103, %v100, %v102
    %v105 = vsel %vm103, %v102, %v100
    %v106 = vlaneseq
    %v107 = vshrl.u32 %v106, 7
    %v108 = vsub.s32 3, %v107
    %v109 = vrot.slane %v38, %v108
    %v110 = vlaneseq
    %v111 = vshrl.u32 %v110, 7
    %v112 = vsub.s32 3, %v111
    %v113 = vrot.slane %v39, %v112
    %v114 = vmul.f32 %v105, %v109
    %v115 = vmul.f32 %v104, %v113
    %v116 = vsub.f32 %v114, %v36
    %v117 = vsub.f32 %v115, %v37
    %118 = vrot.lane.b32.xlu0 %v36, 127
    %v119 = vpop.permute.xlu0 %118
    %120 = vrot.lane.b32.xlu0 %v37, 127
    %v121 = vpop.permute.xlu0 %120
    %vm122 = vcmp.lt.s32.totalorder %v45, 127
    %v123 = vsel %vm122, %v119, %v121
    %v124 = vsel %vm122, %v121, %v119
    %v125 = vlaneseq
    %v126 = vshrl.u32 %v125, 7
    %v127 = vsub.s32 4, %v126
    %v128 = vrot.slane %v38, %v127
    %v129 = vlaneseq
    %v130 = vshrl.u32 %v129, 7
    %v131 = vsub.s32 4, %v130
    %v132 = vrot.slane %v39, %v131
    %v133 = vmul.f32 %v123, %v128
    %v134 = vmul.f32 %v124, %v132
    %v135 = vsub.f32 %v133, %v36
    %v136 = vsub.f32 %v134, %v37
    %137 = vrot.lane.b32.xlu0 %v36, 113
    %v138 = vpop.permute.xlu0 %137
    %139 = vrot.lane.b32.xlu0 %v37, 113
    %v140 = vpop.permute.xlu0 %139
    %vm141 = vcmp.lt.s32.totalorder %v45, 113
    %v142 = vsel %vm141, %v138, %v140
    %v143 = vsel %vm141, %v140, %v138
    %v144 = vlaneseq
    %v145 = vshrl.u32 %v144, 7
    %v146 = vsub.s32 5, %v145
    %v147 = vrot.slane %v38, %v146
    %v148 = vlaneseq
    %v149 = vshrl.u32 %v148, 7
    %v150 = vsub.s32 5, %v149
    %v151 = vrot.slane %v39, %v150
    %v152 = vmul.f32 %v142, %v147
    %v153 = vmul.f32 %v143, %v151
    %v154 = vsub.f32 %v152, %v36
    %v155 = vsub.f32 %v153, %v37
    %156 = vrot.lane.b32.xlu0 %v36, 112
    %v157 = vpop.permute.xlu0 %156
    %158 = vrot.lane.b32.xlu0 %v37, 112
    %v159 = vpop.permute.xlu0 %158
    %vm160 = vcmp.lt.s32.totalorder %v45, 112
    %v161 = vsel %vm160, %v157, %v159
    %v162 = vsel %vm160, %v159, %v157
    %v163 = vlaneseq
    %v164 = vshrl.u32 %v163, 7
    %v165 = vsub.s32 6, %v164
    %v166 = vrot.slane %v38, %v165
    %v167 = vlaneseq
    %v168 = vshrl.u32 %v167, 7
    %v169 = vsub.s32 6, %v168
    %v170 = vrot.slane %v39, %v169
    %v171 = vmul.f32 %v161, %v166
    %v172 = vmul.f32 %v162, %v170
    %v173 = vsub.f32 %v171, %v36
    %v174 = vsub.f32 %v172, %v37
    %175 = vrot.lane.b32.xlu0 %v36, 111
    %v176 = vpop.permute.xlu0 %175
    %177 = vrot.lane.b32.xlu0 %v37, 111
    %v178 = vpop.permute.xlu0 %177
    %vm179 = vcmp.lt.s32.totalorder %v45, 111
    %v180 = vsel %vm179, %v176, %v178
    %v181 = vsel %vm179, %v178, %v176
    %v182 = vlaneseq
    %v183 = vshrl.u32 %v182, 7
    %v184 = vsub.s32 7, %v183
    %v185 = vrot.slane %v38, %v184
    %v186 = vlaneseq
    %v187 = vshrl.u32 %v186, 7
    %v188 = vsub.s32 7, %v187
    %v189 = vrot.slane %v39, %v188
    %v190 = vmul.f32 %v180, %v185
    %v191 = vmul.f32 %v181, %v189
    %v192 = vsub.f32 %v190, %v36
    %v193 = vsub.f32 %v191, %v37
    %vm194 = vcmp.ge.f32.partialorder %v135, 0.0
    %vm195 = vcmp.ge.f32.partialorder %v136, 0.0
    %v196 = vsel %vm194, 1.0, 0.0
    %v197 = vsel %vm195, 1.0, 0.0
    %v198 = vadd.f32 %v196, 0.0
    %v199 = vadd.f32 %v197, 0.0
    %v200 = vmul.f32 %v78, 0.20710678
    %v201 = vmul.f32 %v79, 0.20710678
    %v202 = vmul.f32 %v97, 0.5
    %v203 = vmul.f32 %v98, 0.5
    %v204 = vadd.f32 %v200, %v202
    %v205 = vadd.f32 %v201, %v203
    %v206 = vmul.f32 %v135, 0.20710678
    %v207 = vmul.f32 %v136, 0.20710678
    %v208 = vadd.f32 %v204, %v206
    %v209 = vadd.f32 %v205, %v207
    %vm210 = vcmp.ge.f32.partialorder %v208, 0.0
    %vm211 = vcmp.ge.f32.partialorder %v209, 0.0
    %v212 = vsel %vm210, 2.0, 0.0
    %v213 = vsel %vm211, 2.0, 0.0
    %v214 = vadd.f32 %v198, %v212
    %v215 = vadd.f32 %v199, %v213
    %vm216 = vcmp.ge.f32.partialorder %v78, 0.0
    %vm217 = vcmp.ge.f32.partialorder %v79, 0.0
    %v218 = vsel %vm216, 4.0, 0.0
    %v219 = vsel %vm217, 4.0, 0.0
    %v220 = vadd.f32 %v214, %v218
    %v221 = vadd.f32 %v215, %v219
    %v222 = vmul.f32 %v59, 0.5
    %v223 = vmul.f32 %v60, 0.5
    %v224 = vadd.f32 %v222, %v200
    %v225 = vadd.f32 %v223, %v201
    %v226 = vmul.f32 %v116, 0.20710678
    %v227 = vmul.f32 %v117, 0.20710678
    %v228 = vadd.f32 %v224, %v226
    %v229 = vadd.f32 %v225, %v227
    %vm230 = vcmp.ge.f32.partialorder %v228, 0.0
    %vm231 = vcmp.ge.f32.partialorder %v229, 0.0
    %v232 = vsel %vm230, 8.0, 0.0
    %v233 = vsel %vm231, 8.0, 0.0
    %v234 = vadd.f32 %v220, %v232
    %v235 = vadd.f32 %v221, %v233
    %vm236 = vcmp.ge.f32.partialorder %v116, 0.0
    %vm237 = vcmp.ge.f32.partialorder %v117, 0.0
    %v238 = vsel %vm236, 16.0, 0.0
    %v239 = vsel %vm237, 16.0, 0.0
    %v240 = vadd.f32 %v234, %v238
    %v241 = vadd.f32 %v235, %v239
    %v242 = vmul.f32 %v154, 0.5
    %v243 = vmul.f32 %v155, 0.5
    %v244 = vadd.f32 %v226, %v242
    %v245 = vadd.f32 %v227, %v243
    %v246 = vmul.f32 %v173, 0.20710678
    %v247 = vmul.f32 %v174, 0.20710678
    %v248 = vadd.f32 %v244, %v246
    %v249 = vadd.f32 %v245, %v247
    %vm250 = vcmp.ge.f32.partialorder %v248, 0.0
    %vm251 = vcmp.ge.f32.partialorder %v249, 0.0
    %v252 = vsel %vm250, 32.0, 0.0
    %v253 = vsel %vm251, 32.0, 0.0
    %v254 = vadd.f32 %v240, %v252
    %v255 = vadd.f32 %v241, %v253
    %vm256 = vcmp.ge.f32.partialorder %v173, 0.0
    %vm257 = vcmp.ge.f32.partialorder %v174, 0.0
    %v258 = vsel %vm256, 64.0, 0.0
    %v259 = vsel %vm257, 64.0, 0.0
    %v260 = vadd.f32 %v254, %v258
    %v261 = vadd.f32 %v255, %v259
    %v262 = vadd.f32 %v206, %v246
    %v263 = vadd.f32 %v207, %v247
    %v264 = vmul.f32 %v192, 0.5
    %v265 = vmul.f32 %v193, 0.5
    %v266 = vadd.f32 %v262, %v264
    %v267 = vadd.f32 %v263, %v265
    %vm268 = vcmp.ge.f32.partialorder %v266, 0.0
    %vm269 = vcmp.ge.f32.partialorder %v267, 0.0
    %v270 = vsel %vm268, 128.0, 0.0
    %v271 = vsel %vm269, 128.0, 0.0
    %v272 = vadd.f32 %v260, %v270
    %v273 = vadd.f32 %v261, %v271
    %274 = vst [vmem:[#allocation7] sm:$0xff] %v272
    %275 = vst [vmem:[#allocation7 + $0x8] sm:$0xff] %v273
    // Predicated region
    $region18: #{tpu_custom_call.1} parent=1 // pred_check
      _
    $region19: #{tpu_custom_call.1} parent=1 // pred_check_branch
      %277 = sbr.rel (0) target = $region21
    $region20: #{tpu_custom_call.1} parent=1 // pred_region
      %s279 = ssub.s32 256, 256
      %280 = vsyncadd [#allocation4], %s279
      %s282 = sshll.u32 [#allocation7], 4
      %s283 = int_to_ptr.vmem [resolvable:$true] %s282
      %285 = dma.vmem_to_hbm [thread:$0]  %s283, 256, %s2, [#allocation4]
    $region21: #{tpu_custom_call.1} parent=1 // pred_fallthru
      _
    // Predicated region
    $region22: #{tpu_custom_call.1} parent=1 // pred_check
      _
    $region23: #{tpu_custom_call.1} parent=1 // pred_check_branch
      %287 = sbr.rel (0) target = $region25
    $region24: #{tpu_custom_call.1} parent=1 // pred_region
      %288 = dma.done [#allocation4], 256
    $region25: #{tpu_custom_call.1} parent=1 // pred_fallthru
      _
    %289 = vsyncpa [#allocation3], 1
    %290 = vsyncpa [#allocation6], 1
    %291 = vsyncpa [#allocation4], 1

</llo_original>
